<compile_context>
chip_gen: v6e
topology: v6e:2x2x1
jax: 0.10.0
libtpu: 0.0.40
codegen_flags: <defaults>
</compile_context>

<pallas_src>
import math

import jax
import jax.numpy as jnp
from jax.experimental import pallas as pl
from jax.experimental.pallas import tpu as pltpu


def _round_up(x, m):
    return ((x + m - 1) // m) * m


def _make_kernel(margin, training, keep_prob):
    """Kernel factory; margin / training / keep_prob are static constants."""
    margin = float(margin)
    keep_prob = float(keep_prob)

    def kernel(*refs):
        if training:
            seed_ref, x_ref, wn_ref, bn_ref, tar_ref = refs
        else:
            x_ref, wn_ref, bn_ref, tar_ref = refs

        x = x_ref[...]                                     # (TB, D), matmul dtype

        if training:
            # Fused dropout(p = 1-keep_prob): mask generation rides the idle
            # VPU/misc slots under the MXU instead of a separate HBM pass.
            pltpu.prng_seed(seed_ref[0] + pl.program_id(0))
            bits = pltpu.bitcast(pltpu.prng_random_bits(x.shape), jnp.uint32)
            thresh = jnp.uint32(min(int(keep_prob * 2.0 ** 32), 2 ** 32 - 1))
            x = jnp.where(bits < thresh, x * (1.0 / keep_prob),
                          jnp.zeros_like(x))

        # || [x, 1] || per row (f32); only needed for the margin term.
        xf = x.astype(jnp.float32)
        norm = jnp.sqrt(jnp.sum(xf * xf, axis=-1, keepdims=True) + 1.0)  # (TB,1)

        # ||x_cat|| * cos == x @ Wn[:D] + Wn[D]  (weights pre-normalized in the
        # wrapper, already transposed to the MXU-native (K, N) layout).
        raw = jnp.dot(x, wn_ref[...], preferred_element_type=jnp.float32)
        raw = raw + bn_ref[...]                            # (TB, N) f32

        # pscore = norm * (cos - margin) == raw - norm*margin  (exact fold).
        pscore = raw - norm * margin

        # Row softmax (shift-invariant; exact reciprocal on a (TB,1) vector).
        mx = jnp.max(pscore, axis=-1, keepdims=True)
        e = jnp.exp(pscore - mx)
        # TODO(synk): on v6e/v7x a bf16 exp roughly doubles EUP throughput for
        # small-D configs; kept f32 here to stay optimal on v5e as well.
        inv_den = pl.reciprocal(jnp.sum(e, axis=-1, keepdims=True), approx=False)
        tar_ref[...] = (e * inv_den).astype(tar_ref.dtype)

    return kernel


def fully_connect_lmcl(speaker_vec, weight, bias, lmcl_margin, *,
                       block_b=256, matmul_dtype=jnp.bfloat16,
                       out_dtype=jnp.bfloat16, training=False,
                       dropout_p=0.4, dropout_seed=0):
    """Forward pass of fullyConnectLMCL. Returns (speakerVector, tar)."""
    B, D = speaker_vec.shape
    N, D2 = weight.shape
    assert D == D2, "weight must be (target_num, spkVec_dim)"

    # ---- hoisted weight prep (once per call, outside the batch loop) -------
    # cattedWeight = [W^T ; b] (D+1, N), column-normalized; kept as a (D, N)
    # matrix plus a (1, N) bias row so every block stays (8,128)-aligned.
    w_t = weight.astype(jnp.float32).T                       # (D, N)
    b_row = bias.astype(jnp.float32).reshape(1, N)            # (1, N)
    col_sq = jnp.sum(w_t * w_t, axis=0, keepdims=True) + b_row * b_row
    inv_col_norm = jax.lax.rsqrt(col_sq)
    wn = (w_t * inv_col_norm).astype(matmul_dtype)             # (D, N)
    bn = (b_row * inv_col_norm).astype(jnp.float32)            # (1, N)

    # Pad N to a lane-dense multiple of 128 (unmasked vst on the output).
    # Padded columns get a huge negative bias so their exp underflows to 0 and
    # the softmax over the real N columns is unchanged; sliced off afterwards.
    n_pad = _round_up(N, 128)
    if n_pad != N:
        wn = jnp.pad(wn, ((0, 0), (0, n_pad - N)))
        bn = jnp.pad(bn, ((0, 0), (0, n_pad - N)), constant_values=-1e30)

    # ---- batch tiling -------------------------------------------------------
    # bf16 activations: halves the per-step x DMA; accumulation stays f32.
    x = speaker_vec.astype(matmul_dtype)
    tb = min(block_b, _round_up(B, 8))        # NOTE: 128 is enough to fill v5e's MXU
    b_pad = _round_up(B, tb)
    if b_pad != B:
        x = jnp.pad(x, ((0, b_pad - B), (0, 0)))

    # ---- honest VMEM budget -------------------------------------------------
    try:
        vmem_cap = int(pltpu.get_tpu_info().vmem_capacity_bytes)
    except Exception:
        vmem_cap = 64 * 1024 * 1024            # conservative (v7x) default
    vmem_headroom = int(vmem_cap * 0.85)       # leave room for compiler scratch

    in_item = jnp.dtype(matmul_dtype).itemsize
    out_item = jnp.dtype(out_dtype).itemsize

    def _vmem_limit(weight_bufs):
        need = (weight_bufs * (D * n_pad * in_item + n_pad * 4)   # wn + bn
                + 2 * tb * D * in_item                            # x tile (dbl buf)
                + 2 * tb * n_pad * out_item                       # out tile (dbl buf)
                + 4 * tb * n_pad * 4)                             # f32 intermediates
        return int(min(vmem_headroom, max(32 * 1024 * 1024, 2 * need)))

    kernel = _make_kernel(lmcl_margin, training, 1.0 - dropout_p)
    grid = (b_pad // tb,)

    # TODO(synk): for very large target_num where (D, n_pad) no longer fits in
    # VMEM (esp. v7x's 64 MiB), tile N with an online-softmax accumulator and a
    # cheap finalize pass.
    def _run(weight_pipeline_mode, weight_bufs):
        w_kwargs = ({} if weight_pipeline_mode is None
                    else dict(pipeline_mode=weight_pipeline_mode))
        in_specs = [
            pl.BlockSpec((tb, D), lambda i: (i, 0)),                  # x batch tile
            pl.BlockSpec((D, n_pad), lambda i: (0, 0), **w_kwargs),   # resident Wn
            pl.BlockSpec((1, n_pad), lambda i: (0, 0), **w_kwargs),   # resident bn
        ]
        args = [x, wn, bn]
        if training:
            in_specs.insert(0, pl.BlockSpec(memory_space=pltpu.MemorySpace.SMEM))
            args.insert(0, jnp.asarray([dropout_seed], dtype=jnp.int32))
        return pl.pallas_call(
            kernel,
            out_shape=jax.ShapeDtypeStruct((b_pad, n_pad), out_dtype),
            grid=grid,
            in_specs=in_specs,
            out_specs=pl.BlockSpec((tb, n_pad), lambda i: (i, 0)),
            compiler_params=pltpu.CompilerParams(
                dimension_semantics=("parallel",),
                vmem_limit_bytes=_vmem_limit(weight_bufs)),
        )(*args)

    try:
        # The weight's index_map is constant -> fetched once; single-buffer it
        # to free D*n_pad*itemsize of VMEM (matters on v7x's 64 MiB).
        tar = _run(pl.Buffered(1), 1)
    except Exception:
        # Fallback if this jax build rejects buffer_count=1 on pallas_call.
        tar = _run(None, 2)

    tar = tar[:B, :N]
    return speaker_vec, tar


def _reference(x, weight, bias, margin):
    """Pure-JAX mirror of the PyTorch forward (eval mode)."""
    x_cat = jnp.concatenate([x, jnp.ones((x.shape[0], 1), x.dtype)], axis=1)
    w_cat = jnp.concatenate([weight.T, bias.reshape(1, -1)], axis=0)
    w_len = jnp.sqrt(jnp.sum(w_cat * w_cat, axis=0, keepdims=True))
    x_len = jnp.sqrt(jnp.sum(x_cat * x_cat, axis=1, keepdims=True))
    cos = (x_cat / x_len) @ (w_cat / w_len)
    pscore = x_len * (cos - margin)
    return jax.nn.softmax(pscore, axis=1)


if __name__ == "__main__":
    # Small shapes consistent with the module (spkVec_dim -> D, target_num -> N).
    # N is deliberately not a multiple of 128 to exercise the lane-padding path.
    B, D, N = 8, 128, 250
    lmcl_margin = 0.2

    key = jax.random.PRNGKey(0)
    kx, kw = jax.random.split(key)

    x = jax.random.normal(kx, (B, D), dtype=jnp.float32)

    # xavier_normal_ init for nn.Linear(D, N).weight of shape (N, D); bias = 0.
    std = math.sqrt(2.0 / (D + N))
    weight = std * jax.random.normal(kw, (N, D), dtype=jnp.float32)
    bias = jnp.zeros((N,), dtype=jnp.float32)

    spk_out, tar = fully_connect_lmcl(x, weight, bias, lmcl_margin)
    tar = jax.block_until_ready(tar)

    ref = _reference(x, weight, bias, lmcl_margin)

    tar_f32 = tar.astype(jnp.float32)
    row_sums = jnp.sum(tar_f32, axis=-1)
    assert tar.shape == (B, N)
    assert bool(jnp.all(jnp.abs(row_sums - 1.0) < 1e-2)), "softmax rows do not sum to 1"
    assert bool(jnp.max(jnp.abs(tar_f32 - ref)) < 1e-2), "kernel deviates from reference"
    assert spk_out.shape == x.shape

    print("KERNEL_OK")
</pallas_src>

<mosaic_0001>
module attributes {stable_mosaic.version = 11 : i64} {
  func.func @kernel(%arg0: i32, %arg1: memref<8x128xbf16, #tpu.memory_space<vmem>>, %arg2: memref<128x256xbf16, #tpu.memory_space<vmem>>, %arg3: memref<1x256xf32, #tpu.memory_space<vmem>>, %arg4: memref<8x256xbf16, #tpu.memory_space<vmem>>) attributes {dimension_semantics = [#tpu.dimension_semantics<parallel>], iteration_bounds = array<i64: 1>, scalar_prefetch = 0 : i64, scratch_operands = 0 : i64, tpu.core_type = #tpu.core_type<tc>, window_params = [{transform_indices = @transform_0, window_bounds = array<i64: 8, 128>}, {pipeline_mode = #tpu.pipeline_mode<synchronous>, transform_indices = @transform_1, window_bounds = array<i64: 128, 256>}, {pipeline_mode = #tpu.pipeline_mode<synchronous>, transform_indices = @transform_2, window_bounds = array<i64: 1, 256>}, {transform_indices = @transform_3, window_bounds = array<i64: 8, 256>}]} {
    %c0 = arith.constant 0 : index
    %c0_0 = arith.constant 0 : index
    %0 = vector.load %arg1[%c0, %c0_0] : memref<8x128xbf16, #tpu.memory_space<vmem>>, vector<8x128xbf16>
    %1 = arith.extf %0 : vector<8x128xbf16> to vector<8x128xf32>
    %2 = arith.mulf %1, %1 : vector<8x128xf32>
    %cst = arith.constant dense<0.000000e+00> : vector<8xf32>
    %3 = vector.multi_reduction <add>, %2, %cst [1] : vector<8x128xf32> to vector<8xf32>
    %4 = vector.shape_cast %3 : vector<8xf32> to vector<8x1xf32>
    %cst_1 = arith.constant 1.000000e+00 : f32
    %5 = vector.broadcast %cst_1 : f32 to vector<8x1xf32>
    %6 = arith.addf %4, %5 : vector<8x1xf32>
    %7 = math.sqrt %6 : vector<8x1xf32>
    %c0_2 = arith.constant 0 : index
    %c0_3 = arith.constant 0 : index
    %8 = vector.load %arg2[%c0_2, %c0_3] : memref<128x256xbf16, #tpu.memory_space<vmem>>, vector<128x256xbf16>
    %cst_4 = arith.constant dense<0.000000e+00> : vector<8x256xf32>
    %9 = tpu.matmul %0, %8, %cst_4 {dimension_numbers = #tpu.dot_dimension_numbers<[1], [0], [0], [1], [0, 0, 1, 1], [], []>} : vector<8x128xbf16>, vector<128x256xbf16>, vector<8x256xf32> -> vector<8x256xf32>
    %c0_5 = arith.constant 0 : index
    %c0_6 = arith.constant 0 : index
    %10 = vector.load %arg3[%c0_5, %c0_6] : memref<1x256xf32, #tpu.memory_space<vmem>>, vector<1x256xf32>
    %11 = vector.broadcast %10 : vector<1x256xf32> to vector<8x256xf32>
    %12 = arith.addf %9, %11 : vector<8x256xf32>
    %cst_7 = arith.constant 2.000000e-01 : f32
    %13 = vector.broadcast %cst_7 : f32 to vector<8x1xf32>
    %14 = arith.mulf %7, %13 : vector<8x1xf32>
    %15 = vector.broadcast %14 : vector<8x1xf32> to vector<8x256xf32>
    %16 = arith.subf %12, %15 : vector<8x256xf32>
    %cst_8 = arith.constant dense<0xFF800000> : vector<8xf32>
    %17 = vector.multi_reduction <maximumf>, %16, %cst_8 [1] : vector<8x256xf32> to vector<8xf32>
    %18 = vector.shape_cast %17 : vector<8xf32> to vector<8x1xf32>
    %19 = vector.broadcast %18 : vector<8x1xf32> to vector<8x256xf32>
    %20 = arith.subf %16, %19 : vector<8x256xf32>
    %21 = math.exp %20 : vector<8x256xf32>
    %cst_9 = arith.constant dense<0.000000e+00> : vector<8xf32>
    %22 = vector.multi_reduction <add>, %21, %cst_9 [1] : vector<8x256xf32> to vector<8xf32>
    %23 = vector.shape_cast %22 : vector<8xf32> to vector<8x1xf32>
    %24 = tpu.reciprocal %23 : vector<8x1xf32> -> vector<8x1xf32>
    %25 = vector.broadcast %24 : vector<8x1xf32> to vector<8x256xf32>
    %26 = arith.mulf %21, %25 : vector<8x256xf32>
    %27 = arith.truncf %26 : vector<8x256xf32> to vector<8x256xbf16>
    %c0_10 = arith.constant 0 : index
    %c0_11 = arith.constant 0 : index
    %28 = vector.load %arg4[%c0_10, %c0_11] : memref<8x256xbf16, #tpu.memory_space<vmem>>, vector<8x256xbf16>
    tpu.vector_store %arg4[%c0_10, %c0_11], %27 {strides = array<i32>} : memref<8x256xbf16, #tpu.memory_space<vmem>>, vector<8x256xbf16>,
    return
  }
  func.func @transform_0(%arg0: i32) -> (i32, i32) {
    %c0_i32 = arith.constant 0 : i32
    %c0_i32_0 = arith.constant 0 : i32
    return %arg0, %c0_i32 : i32, i32
  }
  func.func @transform_1(%arg0: i32) -> (i32, i32) {
    %c0_i32 = arith.constant 0 : i32
    %c0_i32_0 = arith.constant 0 : i32
    %c0_i32_1 = arith.constant 0 : i32
    return %c0_i32, %c0_i32_0 : i32, i32
  }
  func.func @transform_2(%arg0: i32) -> (i32, i32) {
    %c0_i32 = arith.constant 0 : i32
    %c0_i32_0 = arith.constant 0 : i32
    %c0_i32_1 = arith.constant 0 : i32
    return %c0_i32, %c0_i32_0 : i32, i32
  }
  func.func @transform_3(%arg0: i32) -> (i32, i32) {
    %c0_i32 = arith.constant 0 : i32
    %c0_i32_0 = arith.constant 0 : i32
    return %arg0, %c0_i32 : i32, i32
  }
}

module attributes {stable_mosaic.version = 11 : i64} {
  func.func @kernel(%arg0: i32, %arg1: memref<8x128xbf16, #tpu.memory_space<vmem>>, %arg2: memref<128x256xbf16, #tpu.memory_space<vmem>>, %arg3: memref<1x256xf32, #tpu.memory_space<vmem>>, %arg4: memref<8x256xbf16, #tpu.memory_space<vmem>>) attributes {dimension_semantics = [#tpu.dimension_semantics<parallel>], iteration_bounds = array<i64: 1>, scalar_prefetch = 0 : i64, scratch_operands = 0 : i64, tpu.core_type = #tpu.core_type<tc>, window_params = [{transform_indices = @transform_0, window_bounds = array<i64: 8, 128>}, {pipeline_mode = #tpu.pipeline_mode<synchronous>, transform_indices = @transform_1, window_bounds = array<i64: 128, 256>}, {pipeline_mode = #tpu.pipeline_mode<synchronous>, transform_indices = @transform_2, window_bounds = array<i64: 1, 256>}, {transform_indices = @transform_3, window_bounds = array<i64: 8, 256>}]} {
    %c0 = arith.constant 0 : index
    %c0_0 = arith.constant 0 : index
    %0 = vector.load %arg1[%c0, %c0_0] : memref<8x128xbf16, #tpu.memory_space<vmem>>, vector<8x128xbf16>
    %1 = arith.extf %0 : vector<8x128xbf16> to vector<8x128xf32>
    %2 = arith.mulf %1, %1 : vector<8x128xf32>
    %cst = arith.constant dense<0.000000e+00> : vector<8xf32>
    %3 = vector.multi_reduction <add>, %2, %cst [1] : vector<8x128xf32> to vector<8xf32>
    %4 = vector.shape_cast %3 : vector<8xf32> to vector<8x1xf32>
    %cst_1 = arith.constant 1.000000e+00 : f32
    %5 = vector.broadcast %cst_1 : f32 to vector<8x1xf32>
    %6 = arith.addf %4, %5 : vector<8x1xf32>
    %7 = math.sqrt %6 : vector<8x1xf32>
    %c0_2 = arith.constant 0 : index
    %c0_3 = arith.constant 0 : index
    %8 = vector.load %arg2[%c0_2, %c0_3] : memref<128x256xbf16, #tpu.memory_space<vmem>>, vector<128x256xbf16>
    %cst_4 = arith.constant dense<0.000000e+00> : vector<8x256xf32>
    %9 = tpu.matmul %0, %8, %cst_4 {dimension_numbers = #tpu.dot_dimension_numbers<[1], [0], [0], [1], [0, 0, 1, 1], [], []>} : vector<8x128xbf16>, vector<128x256xbf16>, vector<8x256xf32> -> vector<8x256xf32>
    %c0_5 = arith.constant 0 : index
    %c0_6 = arith.constant 0 : index
    %10 = vector.load %arg3[%c0_5, %c0_6] : memref<1x256xf32, #tpu.memory_space<vmem>>, vector<1x256xf32>
    %11 = vector.broadcast %10 : vector<1x256xf32> to vector<8x256xf32>
    %12 = arith.addf %9, %11 : vector<8x256xf32>
    %cst_7 = arith.constant 2.000000e-01 : f32
    %13 = vector.broadcast %cst_7 : f32 to vector<8x1xf32>
    %14 = arith.mulf %7, %13 : vector<8x1xf32>
    %15 = vector.broadcast %14 : vector<8x1xf32> to vector<8x256xf32>
    %16 = arith.subf %12, %15 : vector<8x256xf32>
    %cst_8 = arith.constant dense<0xFF800000> : vector<8xf32>
    %17 = vector.multi_reduction <maximumf>, %16, %cst_8 [1] : vector<8x256xf32> to vector<8xf32>
    %18 = vector.shape_cast %17 : vector<8xf32> to vector<8x1xf32>
    %19 = vector.broadcast %18 : vector<8x1xf32> to vector<8x256xf32>
    %20 = arith.subf %16, %19 : vector<8x256xf32>
    %21 = math.exp %20 : vector<8x256xf32>
    %cst_9 = arith.constant dense<0.000000e+00> : vector<8xf32>
    %22 = vector.multi_reduction <add>, %21, %cst_9 [1] : vector<8x256xf32> to vector<8xf32>
    %23 = vector.shape_cast %22 : vector<8xf32> to vector<8x1xf32>
    %24 = tpu.reciprocal %23 : vector<8x1xf32> -> vector<8x1xf32>
    %25 = vector.broadcast %24 : vector<8x1xf32> to vector<8x256xf32>
    %26 = arith.mulf %21, %25 : vector<8x256xf32>
    %27 = arith.truncf %26 : vector<8x256xf32> to vector<8x256xbf16>
    %c0_10 = arith.constant 0 : index
    %c0_11 = arith.constant 0 : index
    %28 = vector.load %arg4[%c0_10, %c0_11] : memref<8x256xbf16, #tpu.memory_space<vmem>>, vector<8x256xbf16>
    tpu.vector_store %arg4[%c0_10, %c0_11], %27 {strides = array<i32>} : memref<8x256xbf16, #tpu.memory_space<vmem>>, vector<8x256xbf16>,
    return
  }
  func.func @transform_0(%arg0: i32) -> (i32, i32) {
    %c0_i32 = arith.constant 0 : i32
    %c0_i32_0 = arith.constant 0 : i32
    return %arg0, %c0_i32 : i32, i32
  }
  func.func @transform_1(%arg0: i32) -> (i32, i32) {
    %c0_i32 = arith.constant 0 : i32
    %c0_i32_0 = arith.constant 0 : i32
    %c0_i32_1 = arith.constant 0 : i32
    return %c0_i32, %c0_i32_0 : i32, i32
  }
  func.func @transform_2(%arg0: i32) -> (i32, i32) {
    %c0_i32 = arith.constant 0 : i32
    %c0_i32_0 = arith.constant 0 : i32
    %c0_i32_1 = arith.constant 0 : i32
    return %c0_i32, %c0_i32_0 : i32, i32
  }
  func.func @transform_3(%arg0: i32) -> (i32, i32) {
    %c0_i32 = arith.constant 0 : i32
    %c0_i32_0 = arith.constant 0 : i32
    return %arg0, %c0_i32 : i32, i32
  }
}

</mosaic_0001>

<llo_original>
// kernel: tpu_custom_call.1
$region0: #{tpu_custom_call.1}
  #allocation0 [shape = 'u32[]', space=smem, size = 0x4, offset = 0x4, fixed_abs, tag = 'smem constant byte address 0x4 - core index']
  #allocation1 [shape = 'u32[144,128]{1,0:T(1,128)}', space=vmem, size = 0x12000, scoped, tag = 'internal scratch']
  %s0 = inlined_call_operand.hbm [shape: bf16[8,128], index: 0, kind: input, shape index: {}]
  %s1 = inlined_call_operand.hbm [shape: bf16[128,256], index: 1, kind: input, shape index: {}]
  %s2 = inlined_call_operand.vmem [shape: f32[1,256], index: 2, kind: input, shape index: {}]
  %s3 = inlined_call_operand.hbm [shape: bf16[8,256], index: 3, kind: output, shape index: {}]
  %s4 = sld [smem:[#allocation0]]
  $region30: #{tpu_custom_call.1} parent=0
    _
  %s6 = ssub.s32 1, %s4
  %s7 = scalar_select 0, %s6, %s4
  $region1: #{tpu_custom_call.1} parent=0
    #allocation2 [shape = 'u8[2048]{0}', space=vmem, size = 0x800, scoped, tag = 'input window, operand 0, single buffered']
    #allocation3 [shape = 's32[1]{0}', space=sflag, size = 0x4, scoped, tag = 'scoped memory for tpu_custom_call.1']
    #allocation4 [shape = 's32[1]{0}', space=sflag, size = 0x4, scoped, tag = 'scoped memory for tpu_custom_call.1']
    #allocation5 [shape = 'u8[65536]{0}', space=vmem, size = 0x10000, scoped, tag = 'input window, operand 1, single buffered']
    #allocation6 [shape = 's32[1]{0}', space=sflag, size = 0x4, scoped, tag = 'scoped memory for tpu_custom_call.1']
    #allocation7 [shape = 'u8[4096]{0}', space=vmem, size = 0x1000, scoped, tag = 'output window, operand 0, single buffered']
    %8 = vsyncpa [#allocation3], 0
    %9 = vsyncpa [#allocation6], 0
    %10 = vsyncpa [#allocation4], 0
    // Predicated region
    $region2: #{tpu_custom_call.1} parent=1 // pred_check
      _
    $region3: #{tpu_custom_call.1} parent=1 // pred_check_branch
      %12 = sbr.rel (0) target = $region5
    $region4: #{tpu_custom_call.1} parent=1 // pred_region
      %s14 = ssub.s32 64, 64
      %15 = vsyncadd [#allocation3], %s14
      %s17 = sshll.u32 [#allocation2], 4
      %s18 = int_to_ptr.vmem [resolvable:$true] %s17
      %20 = dma.hbm_to_vmem [thread:$0]  %s0, 64, %s18, [#allocation3]
    $region5: #{tpu_custom_call.1} parent=1 // pred_fallthru
      _
    // Predicated region
    $region6: #{tpu_custom_call.1} parent=1 // pred_check
      _
    $region7: #{tpu_custom_call.1} parent=1 // pred_check_branch
      %22 = sbr.rel (0) target = $region9
    $region8: #{tpu_custom_call.1} parent=1 // pred_region
      %s24 = ssub.s32 2048, 2048
      %25 = vsyncadd [#allocation6], %s24
      %s26 = sshll.u32 [#allocation5], 4
      %s27 = int_to_ptr.vmem [resolvable:$true] %s26
      %32 = dma.hbm_to_vmem [thread:$0]  %s1, 2048, %s27, [#allocation6], 128, 128, 8
    $region9: #{tpu_custom_call.1} parent=1 // pred_fallthru
      _
    // Predicated region
    $region10: #{tpu_custom_call.1} parent=1 // pred_check
      _
    $region11: #{tpu_custom_call.1} parent=1 // pred_check_branch
      %34 = sbr.rel (0) target = $region13
    $region12: #{tpu_custom_call.1} parent=1 // pred_region
      _
    $region13: #{tpu_custom_call.1} parent=1 // pred_fallthru
      _
    // Predicated region
    $region14: #{tpu_custom_call.1} parent=1 // pred_check
      _
    $region15: #{tpu_custom_call.1} parent=1 // pred_check_branch
      %36 = sbr.rel (0) target = $region17
    $region16: #{tpu_custom_call.1} parent=1 // pred_region
      %37 = dma.done [#allocation3], 64
    $region17: #{tpu_custom_call.1} parent=1 // pred_fallthru
      _
    // Predicated region
    $region18: #{tpu_custom_call.1} parent=1 // pred_check
      _
    $region19: #{tpu_custom_call.1} parent=1 // pred_check_branch
      %39 = sbr.rel (0) target = $region21
    $region20: #{tpu_custom_call.1} parent=1 // pred_region
      %40 = dma.done [#allocation6], 2048
    $region21: #{tpu_custom_call.1} parent=1 // pred_fallthru
      _
    %v42 = vld [vmem:[#allocation2] sm:$0xf]
    %v43 = vunpack.c.l.bf16 %v42
    %v44 = vmul.f32 %v43, %v43
    %45 = vadd.xlane.f32.xlu0 %v44
    %v46 = vpop.xlane.xlu0 %45
    %v47 = vadd.f32 %v46, 1.0
    %v48 = vrsqrt.pop %v47
    %v49 = vmul.f32 %v47, %v48
    %vm50 = vcmp.eq.f32.partialorder %v47, inf
    %v51 = vsel %vm50, %v47, %v49
    %vm52 = vcmp.eq.f32.partialorder %v47, 0.0
    %v53 = vand.u32 %v47, 2147483648
    %v54 = vsel %vm52, %v53, %v51
    %v55 = vld [vmem:[#allocation5] sm:$0xff]
    %v56 = vld [vmem:[#allocation5 + $0x8] sm:$0xff]
    %v57 = vld [vmem:[#allocation5 + $0x10] sm:$0xff]
    %v58 = vld [vmem:[#allocation5 + $0x18] sm:$0xff]
    %v59 = vld [vmem:[#allocation5 + $0x20] sm:$0xff]
    %v60 = vld [vmem:[#allocation5 + $0x28] sm:$0xff]
    %v61 = vld [vmem:[#allocation5 + $0x30] sm:$0xff]
    %v62 = vld [vmem:[#allocation5 + $0x38] sm:$0xff]
    %v63 = vld [vmem:[#allocation5 + $0x40] sm:$0xff]
    %v64 = vld [vmem:[#allocation5 + $0x48] sm:$0xff]
    %v65 = vld [vmem:[#allocation5 + $0x50] sm:$0xff]
    %v66 = vld [vmem:[#allocation5 + $0x58] sm:$0xff]
    %v67 = vld [vmem:[#allocation5 + $0x60] sm:$0xff]
    %v68 = vld [vmem:[#allocation5 + $0x68] sm:$0xff]
    %v69 = vld [vmem:[#allocation5 + $0x70] sm:$0xff]
    %v70 = vld [vmem:[#allocation5 + $0x78] sm:$0xff]
    %v71 = vld [vmem:[%s2] sm:$0x3]
    %v73 = vlaneseq
    %v74 = vshrl.u32 %v73, 7
    %v75 = vsub.s32 0, %v74
    %v76 = vrot.slane %v71, %v75
    %v77 = vlaneseq
    %v78 = vshrl.u32 %v77, 7
    %v79 = vsub.s32 1, %v78
    %v80 = vrot.slane %v71, %v79
    %v99 = vunpack.c.l.b16 %v55
    %v100 = vunpack.c.h.b16 %v55
    %v101 = vunpack.c.l.b16 %v56
    %v102 = vunpack.c.h.b16 %v56
    %v103 = vunpack.c.l.b16 %v57
    %v104 = vunpack.c.h.b16 %v57
    %v105 = vunpack.c.l.b16 %v58
    %v106 = vunpack.c.h.b16 %v58
    %v107 = vunpack.c.l.b16 %v59
    %v108 = vunpack.c.h.b16 %v59
    %v109 = vunpack.c.l.b16 %v60
    %v110 = vunpack.c.h.b16 %v60
    %v111 = vunpack.c.l.b16 %v61
    %v112 = vunpack.c.h.b16 %v61
    %v113 = vunpack.c.l.b16 %v62
    %v114 = vunpack.c.h.b16 %v62
    %v115 = vunpack.c.l.b16 %v63
    %v116 = vunpack.c.h.b16 %v63
    %v117 = vunpack.c.l.b16 %v64
    %v118 = vunpack.c.h.b16 %v64
    %v119 = vunpack.c.l.b16 %v65
    %v120 = vunpack.c.h.b16 %v65
    %v121 = vunpack.c.l.b16 %v66
    %v122 = vunpack.c.h.b16 %v66
    %v123 = vunpack.c.l.b16 %v67
    %v124 = vunpack.c.h.b16 %v67
    %v125 = vunpack.c.l.b16 %v68
    %v126 = vunpack.c.h.b16 %v68
    %v127 = vunpack.c.l.b16 %v69
    %v128 = vunpack.c.h.b16 %v69
    %v129 = vunpack.c.l.b16 %v70
    %v130 = vunpack.c.h.b16 %v70
    %v131 = vpack.c.b16 %v101, %v99
    %v132 = vpack.c.b16 %v102, %v100
    %v133 = vpack.c.b16 %v105, %v103
    %v134 = vpack.c.b16 %v106, %v104
    %v135 = vpack.c.b16 %v109, %v107
    %v136 = vpack.c.b16 %v110, %v108
    %v137 = vpack.c.b16 %v113, %v111
    %v138 = vpack.c.b16 %v114, %v112
    %v139 = vpack.c.b16 %v117, %v115
    %v140 = vpack.c.b16 %v118, %v116
    %v141 = vpack.c.b16 %v121, %v119
    %v142 = vpack.c.b16 %v122, %v120
    %v143 = vpack.c.b16 %v125, %v123
    %v144 = vpack.c.b16 %v126, %v124
    %v145 = vpack.c.b16 %v129, %v127
    %v146 = vpack.c.b16 %v130, %v128
    %163 = vmatprep.subr.bf16.mxu0 %v146
    %164 = vmatpush1.bf16.msra.mxu0 %v145
    %165 = vmatprep.subr.bf16.mxu0 %v144
    %166 = vmatpush1.bf16.msra.mxu0 %v143
    %167 = vmatprep.subr.bf16.mxu0 %v142
    %168 = vmatpush1.bf16.msra.mxu0 %v141
    %169 = vmatprep.subr.bf16.mxu0 %v140
    %170 = vmatpush1.bf16.msra.mxu0 %v139
    %171 = vmatprep.subr.bf16.mxu0 %v138
    %172 = vmatpush1.bf16.msra.mxu0 %v137
    %173 = vmatprep.subr.bf16.mxu0 %v136
    %174 = vmatpush1.bf16.msra.mxu0 %v135
    %175 = vmatprep.subr.bf16.mxu0 %v134
    %176 = vmatpush1.bf16.msra.mxu0 %v133
    %177 = vmatprep.subr.bf16.mxu0 %v132
    %178 = vmatpush1.bf16.msra.mxu0 %v131
    %179 = vmatprep.subr.bf16.mxu0 0
    %180 = vmatpush2.bf16.msra.mxu0 0
    %181 = vmatprep.subr.bf16.mxu0 0
    %182 = vmatpush2.bf16.msra.mxu0 0
    %183 = vmatprep.subr.bf16.mxu0 0
    %184 = vmatpush2.bf16.msra.mxu0 0
    %185 = vmatprep.subr.bf16.mxu0 0
    %186 = vmatpush2.bf16.msra.mxu0 0
    %187 = vmatprep.subr.bf16.mxu0 0
    %188 = vmatpush2.bf16.msra.mxu0 0
    %189 = vmatprep.subr.bf16.mxu0 0
    %190 = vmatpush2.bf16.msra.mxu0 0
    %191 = vmatprep.subr.bf16.mxu0 0
    %192 = vmatpush2.bf16.msra.mxu0 0
    %193 = vmatprep.subr.bf16.mxu0 0
    %194 = vmatpush2.bf16.msra.mxu0 0
    %195 = vmatprep.mubr.bf16.mxu0 0
    %196 = vmatmul.mubr.bf16.gmra.mxu0 %v42
    %v197 = vpop.f32.mrf.mxu0
    %v198 = vadd.f32 %v76, %v197
    %v199 = vpop.f32.mrf.mxu0
    %v200 = vadd.f32 %v80, %v199
    %v201 = vpop.f32.mrf.mxu0
    %v202 = vpop.f32.mrf.mxu0
    %203 = vdwg.mxu0
    %v204 = vmul.f32 %v54, 0.2
    %v205 = vsub.f32 %v198, %v204
    %v206 = vsub.f32 %v200, %v204
    %v207 = vmax.f32 %v205, %v206
    %208 = vmax.xlane.f32.xlu0 %v207
    %v209 = vpop.xlane.xlu0 %208
    %v210 = vsub.f32 %v205, %v209
    %v211 = vsub.f32 %v206, %v209
    %v212 = vmul.f32 %v210, 1.442695
    %v213 = vpow.pop %v212
    %v214 = vmul.f32 %v211, 1.442695
    %v215 = vpow.pop %v214
    %v216 = vadd.f32 %v213, %v215
    %217 = vadd.xlane.f32.xlu0 %v216
    %v218 = vpop.xlane.xlu0 %217
    %v219 = vrcp.pop %v218
    %v220 = vmul.f32 %v213, %v219
    %v221 = vmul.f32 %v215, %v219
    %v222 = vpack.c.bf16 %v220, %v220
    %v223 = vpack.c.bf16 %v221, %v221
    %v226 = vunpack.c.l.b16 %v222
    %v227 = vunpack.c.l.b16 %v223
    %v228 = vpack.c.b16 %v227, %v226
    %230 = vst [vmem:[#allocation7] sm:$0xff] %v228
    // Predicated region
    $region22: #{tpu_custom_call.1} parent=1 // pred_check
      _
    $region23: #{tpu_custom_call.1} parent=1 // pred_check_branch
      %232 = sbr.rel (0) target = $region25
    $region24: #{tpu_custom_call.1} parent=1 // pred_region
      %s234 = ssub.s32 128, 128
      %235 = vsyncadd [#allocation4], %s234
      %s237 = sshll.u32 [#allocation7], 4
      %s238 = int_to_ptr.vmem [resolvable:$true] %s237
      %240 = dma.vmem_to_hbm [thread:$0]  %s238, 128, %s3, [#allocation4]
    $region25: #{tpu_custom_call.1} parent=1 // pred_fallthru
      _
    // Predicated region
    $region26: #{tpu_custom_call.1} parent=1 // pred_check
      _
    $region27: #{tpu_custom_call.1} parent=1 // pred_check_branch
      %242 = sbr.rel (0) target = $region29
    $region28: #{tpu_custom_call.1} parent=1 // pred_region
      %243 = dma.done [#allocation4], 128
    $region29: #{tpu_custom_call.1} parent=1 // pred_fallthru
      _
    %244 = vsyncpa [#allocation3], 1
    %245 = vsyncpa [#allocation6], 1
    %246 = vsyncpa [#allocation4], 1

// kernel: tpu_custom_call.1
$region0: #{tpu_custom_call.1}
  #allocation0 [shape = 'u32[]', space=smem, size = 0x4, offset = 0x4, fixed_abs, tag = 'smem constant byte address 0x4 - core index']
  #allocation1 [shape = 'u32[144,128]{1,0:T(1,128)}', space=vmem, size = 0x12000, scoped, tag = 'internal scratch']
  %s0 = inlined_call_operand.hbm [shape: bf16[8,128], index: 0, kind: input, shape index: {}]
  %s1 = inlined_call_operand.hbm [shape: bf16[128,256], index: 1, kind: input, shape index: {}]
  %s2 = inlined_call_operand.vmem [shape: f32[1,256], index: 2, kind: input, shape index: {}]
  %s3 = inlined_call_operand.hbm [shape: bf16[8,256], index: 3, kind: output, shape index: {}]
  %s4 = sld [smem:[#allocation0]]
  $region30: #{tpu_custom_call.1} parent=0
    _
  %s6 = ssub.s32 1, %s4
  %s7 = scalar_select 0, %s6, %s4
  $region1: #{tpu_custom_call.1} parent=0
    #allocation2 [shape = 'u8[2048]{0}', space=vmem, size = 0x800, scoped, tag = 'input window, operand 0, single buffered']
    #allocation3 [shape = 's32[1]{0}', space=sflag, size = 0x4, scoped, tag = 'scoped memory for tpu_custom_call.1']
    #allocation4 [shape = 's32[1]{0}', space=sflag, size = 0x4, scoped, tag = 'scoped memory for tpu_custom_call.1']
    #allocation5 [shape = 'u8[65536]{0}', space=vmem, size = 0x10000, scoped, tag = 'input window, operand 1, single buffered']
    #allocation6 [shape = 's32[1]{0}', space=sflag, size = 0x4, scoped, tag = 'scoped memory for tpu_custom_call.1']
    #allocation7 [shape = 'u8[4096]{0}', space=vmem, size = 0x1000, scoped, tag = 'output window, operand 0, single buffered']
    %8 = vsyncpa [#allocation3], 0
    %9 = vsyncpa [#allocation6], 0
    %10 = vsyncpa [#allocation4], 0
    // Predicated region
    $region2: #{tpu_custom_call.1} parent=1 // pred_check
      _
    $region3: #{tpu_custom_call.1} parent=1 // pred_check_branch
      %12 = sbr.rel (0) target = $region5
    $region4: #{tpu_custom_call.1} parent=1 // pred_region
      %s14 = ssub.s32 64, 64
      %15 = vsyncadd [#allocation3], %s14
      %s17 = sshll.u32 [#allocation2], 4
      %s18 = int_to_ptr.vmem [resolvable:$true] %s17
      %20 = dma.hbm_to_vmem [thread:$0]  %s0, 64, %s18, [#allocation3]
    $region5: #{tpu_custom_call.1} parent=1 // pred_fallthru
      _
    // Predicated region
    $region6: #{tpu_custom_call.1} parent=1 // pred_check
      _
    $region7: #{tpu_custom_call.1} parent=1 // pred_check_branch
      %22 = sbr.rel (0) target = $region9
    $region8: #{tpu_custom_call.1} parent=1 // pred_region
      %s24 = ssub.s32 2048, 2048
      %25 = vsyncadd [#allocation6], %s24
      %s26 = sshll.u32 [#allocation5], 4
      %s27 = int_to_ptr.vmem [resolvable:$true] %s26
      %32 = dma.hbm_to_vmem [thread:$0]  %s1, 2048, %s27, [#allocation6], 128, 128, 8
    $region9: #{tpu_custom_call.1} parent=1 // pred_fallthru
      _
    // Predicated region
    $region10: #{tpu_custom_call.1} parent=1 // pred_check
      _
    $region11: #{tpu_custom_call.1} parent=1 // pred_check_branch
      %34 = sbr.rel (0) target = $region13
    $region12: #{tpu_custom_call.1} parent=1 // pred_region
      _
    $region13: #{tpu_custom_call.1} parent=1 // pred_fallthru
      _
    // Predicated region
    $region14: #{tpu_custom_call.1} parent=1 // pred_check
      _
    $region15: #{tpu_custom_call.1} parent=1 // pred_check_branch
      %36 = sbr.rel (0) target = $region17
    $region16: #{tpu_custom_call.1} parent=1 // pred_region
      %37 = dma.done [#allocation3], 64
    $region17: #{tpu_custom_call.1} parent=1 // pred_fallthru
      _
    // Predicated region
    $region18: #{tpu_custom_call.1} parent=1 // pred_check
      _
    $region19: #{tpu_custom_call.1} parent=1 // pred_check_branch
      %39 = sbr.rel (0) target = $region21
    $region20: #{tpu_custom_call.1} parent=1 // pred_region
      %40 = dma.done [#allocation6], 2048
    $region21: #{tpu_custom_call.1} parent=1 // pred_fallthru
      _
    %v42 = vld [vmem:[#allocation2] sm:$0xf]
    %v43 = vunpack.c.l.bf16 %v42
    %v44 = vmul.f32 %v43, %v43
    %45 = vadd.xlane.f32.xlu0 %v44
    %v46 = vpop.xlane.xlu0 %45
    %v47 = vadd.f32 %v46, 1.0
    %v48 = vrsqrt.pop %v47
    %v49 = vmul.f32 %v47, %v48
    %vm50 = vcmp.eq.f32.partialorder %v47, inf
    %v51 = vsel %vm50, %v47, %v49
    %vm52 = vcmp.eq.f32.partialorder %v47, 0.0
    %v53 = vand.u32 %v47, 2147483648
    %v54 = vsel %vm52, %v53, %v51
    %v55 = vld [vmem:[#allocation5] sm:$0xff]
    %v56 = vld [vmem:[#allocation5 + $0x8] sm:$0xff]
    %v57 = vld [vmem:[#allocation5 + $0x10] sm:$0xff]
    %v58 = vld [vmem:[#allocation5 + $0x18] sm:$0xff]
    %v59 = vld [vmem:[#allocation5 + $0x20] sm:$0xff]
    %v60 = vld [vmem:[#allocation5 + $0x28] sm:$0xff]
    %v61 = vld [vmem:[#allocation5 + $0x30] sm:$0xff]
    %v62 = vld [vmem:[#allocation5 + $0x38] sm:$0xff]
    %v63 = vld [vmem:[#allocation5 + $0x40] sm:$0xff]
    %v64 = vld [vmem:[#allocation5 + $0x48] sm:$0xff]
    %v65 = vld [vmem:[#allocation5 + $0x50] sm:$0xff]
    %v66 = vld [vmem:[#allocation5 + $0x58] sm:$0xff]
    %v67 = vld [vmem:[#allocation5 + $0x60] sm:$0xff]
    %v68 = vld [vmem:[#allocation5 + $0x68] sm:$0xff]
    %v69 = vld [vmem:[#allocation5 + $0x70] sm:$0xff]
    %v70 = vld [vmem:[#allocation5 + $0x78] sm:$0xff]
    %v71 = vld [vmem:[%s2] sm:$0x3]
    %v73 = vlaneseq
    %v74 = vshrl.u32 %v73, 7
    %v75 = vsub.s32 0, %v74
    %v76 = vrot.slane %v71, %v75
    %v77 = vlaneseq
    %v78 = vshrl.u32 %v77, 7
    %v79 = vsub.s32 1, %v78
    %v80 = vrot.slane %v71, %v79
    %v99 = vunpack.c.l.b16 %v55
    %v100 = vunpack.c.h.b16 %v55
    %v101 = vunpack.c.l.b16 %v56
    %v102 = vunpack.c.h.b16 %v56
    %v103 = vunpack.c.l.b16 %v57
    %v104 = vunpack.c.h.b16 %v57
    %v105 = vunpack.c.l.b16 %v58
    %v106 = vunpack.c.h.b16 %v58
    %v107 = vunpack.c.l.b16 %v59
    %v108 = vunpack.c.h.b16 %v59
    %v109 = vunpack.c.l.b16 %v60
    %v110 = vunpack.c.h.b16 %v60
    %v111 = vunpack.c.l.b16 %v61
    %v112 = vunpack.c.h.b16 %v61
    %v113 = vunpack.c.l.b16 %v62
    %v114 = vunpack.c.h.b16 %v62
    %v115 = vunpack.c.l.b16 %v63
    %v116 = vunpack.c.h.b16 %v63
    %v117 = vunpack.c.l.b16 %v64
    %v118 = vunpack.c.h.b16 %v64
    %v119 = vunpack.c.l.b16 %v65
    %v120 = vunpack.c.h.b16 %v65
    %v121 = vunpack.c.l.b16 %v66
    %v122 = vunpack.c.h.b16 %v66
    %v123 = vunpack.c.l.b16 %v67
    %v124 = vunpack.c.h.b16 %v67
    %v125 = vunpack.c.l.b16 %v68
    %v126 = vunpack.c.h.b16 %v68
    %v127 = vunpack.c.l.b16 %v69
    %v128 = vunpack.c.h.b16 %v69
    %v129 = vunpack.c.l.b16 %v70
    %v130 = vunpack.c.h.b16 %v70
    %v131 = vpack.c.b16 %v101, %v99
    %v132 = vpack.c.b16 %v102, %v100
    %v133 = vpack.c.b16 %v105, %v103
    %v134 = vpack.c.b16 %v106, %v104
    %v135 = vpack.c.b16 %v109, %v107
    %v136 = vpack.c.b16 %v110, %v108
    %v137 = vpack.c.b16 %v113, %v111
    %v138 = vpack.c.b16 %v114, %v112
    %v139 = vpack.c.b16 %v117, %v115
    %v140 = vpack.c.b16 %v118, %v116
    %v141 = vpack.c.b16 %v121, %v119
    %v142 = vpack.c.b16 %v122, %v120
    %v143 = vpack.c.b16 %v125, %v123
    %v144 = vpack.c.b16 %v126, %v124
    %v145 = vpack.c.b16 %v129, %v127
    %v146 = vpack.c.b16 %v130, %v128
    %163 = vmatprep.subr.bf16.mxu0 %v146
    %164 = vmatpush1.bf16.msra.mxu0 %v145
    %165 = vmatprep.subr.bf16.mxu0 %v144
    %166 = vmatpush1.bf16.msra.mxu0 %v143
    %167 = vmatprep.subr.bf16.mxu0 %v142
    %168 = vmatpush1.bf16.msra.mxu0 %v141
    %169 = vmatprep.subr.bf16.mxu0 %v140
    %170 = vmatpush1.bf16.msra.mxu0 %v139
    %171 = vmatprep.subr.bf16.mxu0 %v138
    %172 = vmatpush1.bf16.msra.mxu0 %v137
    %173 = vmatprep.subr.bf16.mxu0 %v136
    %174 = vmatpush1.bf16.msra.mxu0 %v135
    %175 = vmatprep.subr.bf16.mxu0 %v134
    %176 = vmatpush1.bf16.msra.mxu0 %v133
    %177 = vmatprep.subr.bf16.mxu0 %v132
    %178 = vmatpush1.bf16.msra.mxu0 %v131
    %179 = vmatprep.subr.bf16.mxu0 0
    %180 = vmatpush2.bf16.msra.mxu0 0
    %181 = vmatprep.subr.bf16.mxu0 0
    %182 = vmatpush2.bf16.msra.mxu0 0
    %183 = vmatprep.subr.bf16.mxu0 0
    %184 = vmatpush2.bf16.msra.mxu0 0
    %185 = vmatprep.subr.bf16.mxu0 0
    %186 = vmatpush2.bf16.msra.mxu0 0
    %187 = vmatprep.subr.bf16.mxu0 0
    %188 = vmatpush2.bf16.msra.mxu0 0
    %189 = vmatprep.subr.bf16.mxu0 0
    %190 = vmatpush2.bf16.msra.mxu0 0
    %191 = vmatprep.subr.bf16.mxu0 0
    %192 = vmatpush2.bf16.msra.mxu0 0
    %193 = vmatprep.subr.bf16.mxu0 0
    %194 = vmatpush2.bf16.msra.mxu0 0
    %195 = vmatprep.mubr.bf16.mxu0 0
    %196 = vmatmul.mubr.bf16.gmra.mxu0 %v42
    %v197 = vpop.f32.mrf.mxu0
    %v198 = vadd.f32 %v76, %v197
    %v199 = vpop.f32.mrf.mxu0
    %v200 = vadd.f32 %v80, %v199
    %v201 = vpop.f32.mrf.mxu0
    %v202 = vpop.f32.mrf.mxu0
    %203 = vdwg.mxu0
    %v204 = vmul.f32 %v54, 0.2
    %v205 = vsub.f32 %v198, %v204
    %v206 = vsub.f32 %v200, %v204
    %v207 = vmax.f32 %v205, %v206
    %208 = vmax.xlane.f32.xlu0 %v207
    %v209 = vpop.xlane.xlu0 %208
    %v210 = vsub.f32 %v205, %v209
    %v211 = vsub.f32 %v206, %v209
    %v212 = vmul.f32 %v210, 1.442695
    %v213 = vpow.pop %v212
    %v214 = vmul.f32 %v211, 1.442695
    %v215 = vpow.pop %v214
    %v216 = vadd.f32 %v213, %v215
    %217 = vadd.xlane.f32.xlu0 %v216
    %v218 = vpop.xlane.xlu0 %217
    %v219 = vrcp.pop %v218
    %v220 = vmul.f32 %v213, %v219
    %v221 = vmul.f32 %v215, %v219
    %v222 = vpack.c.bf16 %v220, %v220
    %v223 = vpack.c.bf16 %v221, %v221
    %v226 = vunpack.c.l.b16 %v222
    %v227 = vunpack.c.l.b16 %v223
    %v228 = vpack.c.b16 %v227, %v226
    %230 = vst [vmem:[#allocation7] sm:$0xff] %v228
    // Predicated region
    $region22: #{tpu_custom_call.1} parent=1 // pred_check
      _
    $region23: #{tpu_custom_call.1} parent=1 // pred_check_branch
      %232 = sbr.rel (0) target = $region25
    $region24: #{tpu_custom_call.1} parent=1 // pred_region
      %s234 = ssub.s32 128, 128
      %235 = vsyncadd [#allocation4], %s234
      %s237 = sshll.u32 [#allocation7], 4
      %s238 = int_to_ptr.vmem [resolvable:$true] %s237
      %240 = dma.vmem_to_hbm [thread:$0]  %s238, 128, %s3, [#allocation4]
    $region25: #{tpu_custom_call.1} parent=1 // pred_fallthru
      _
    // Predicated region
    $region26: #{tpu_custom_call.1} parent=1 // pred_check
      _
    $region27: #{tpu_custom_call.1} parent=1 // pred_check_branch
      %242 = sbr.rel (0) target = $region29
    $region28: #{tpu_custom_call.1} parent=1 // pred_region
      %243 = dma.done [#allocation4], 128
    $region29: #{tpu_custom_call.1} parent=1 // pred_fallthru
      _
    %244 = vsyncpa [#allocation3], 1
    %245 = vsyncpa [#allocation6], 1
    %246 = vsyncpa [#allocation4], 1

</llo_original>
